<compile_context>
chip_gen: v7x
topology: tpu7x:2x2x1
jax: 0.10.0
libtpu: 0.0.40
codegen_flags: <defaults>
</compile_context>

<pallas_src>
import functools

import jax
import jax.numpy as jnp
from jax import lax
from jax.experimental import pallas as pl
from jax.experimental.pallas import tpu as pltpu

LN_EPS = 1e-5


def _round_up(x, m):
    return (x + m - 1) // m * m


def _embed_kernel(tok_ids_ref, pos_ids_ref, tok_tbl_ref, pos_tbl_ref,
                  b_ref, g_ref, beta_ref, o_ref, *, d_model):
    """One grid step: TM flattened (batch*seq) rows -> (TM, DP) padded out."""
    TM = o_ref.shape[0]
    DP = o_ref.shape[1]                 # d_model padded to a multiple of 128
    V = tok_tbl_ref.shape[0]
    S = pos_tbl_ref.shape[0]

    tok_ids = tok_ids_ref[...]          # (TM, 1) int32
    pos_ids = pos_ids_ref[...]          # (TM, 1) int32

    # Fused gather + Linear: one-hot @ (pre-projected, resident) table on the
    # MXU.  bf16 one-hot matmul with f32 accumulation is an exact row-select.
    tok_oh = (tok_ids == lax.broadcasted_iota(jnp.int32, (TM, V), 1)
              ).astype(tok_tbl_ref.dtype)                 # (TM, V) bf16
    pos_oh = (pos_ids == lax.broadcasted_iota(jnp.int32, (TM, S), 1)
              ).astype(pos_tbl_ref.dtype)                 # (TM, S) bf16
    y = jnp.dot(tok_oh, tok_tbl_ref[...], preferred_element_type=jnp.float32)
    y = y + jnp.dot(pos_oh, pos_tbl_ref[...],
                    preferred_element_type=jnp.float32)   # (TM, DP) f32
    y = y + b_ref[...]                                    # padded bias cols = 0

    # LayerNorm over the first d_model features (padded columns hold zeros,
    # so the sum-based mean is exact; masked centering keeps them out of var).
    inv_d = 1.0 / d_model
    mean = jnp.sum(y, axis=-1, keepdims=True) * inv_d
    cent = y - mean
    if DP != d_model:
        valid = (lax.broadcasted_iota(jnp.int32, (1, DP), 1) < d_model
                 ).astype(jnp.float32)
        cent = cent * valid
    var = jnp.sum(cent * cent, axis=-1, keepdims=True) * inv_d
    inv = lax.rsqrt(var + LN_EPS)
    # gamma/beta are zero in padded columns -> padded output columns are 0.
    o_ref[...] = cent * inv * g_ref[...] + beta_ref[...]


def transformer_embedding_fwd(sequence, tok_table, pos_table, w_lin, b_lin,
                              ln_gamma, ln_beta, *, tile_rows=512):
    """sequence: (B, S) int32 token ids -> (B, S, d_model) f32."""
    B, S = sequence.shape
    V, d_emb = tok_table.shape
    d_model = w_lin.shape[0]
    N = B * S
    DP = _round_up(d_model, 128)        # lane-dense padded feature width

    # Row tiling over the flattened (B*S) axis.
    TM = _round_up(min(tile_rows, _round_up(N, 8)), 8)
    N_pad = _round_up(N, TM)
    grid = (N_pad // TM,)

    tok_flat = sequence.reshape(-1).astype(jnp.int32)
    pos_flat = jnp.arange(N, dtype=jnp.int32) % S
    if N_pad > N:
        tok_flat = jnp.pad(tok_flat, (0, N_pad - N))   # padded rows sliced off
        pos_flat = jnp.pad(pos_flat, (0, N_pad - N))
    tok_ids = tok_flat.reshape(N_pad, 1)
    pos_ids = pos_flat.reshape(N_pad, 1)

    # One-time algebraic fusion (wrapper-side, f32): pre-project both tables
    # through the Linear weight, then cast to bf16 for the in-kernel gather.
    w_t = w_lin.T.astype(jnp.float32)                          # (d_emb, d_model)
    fused_tok = tok_table.astype(jnp.float32) @ w_t            # (V, d_model)
    fused_pos = pos_table[:S].astype(jnp.float32) @ w_t        # (S, d_model)

    def pad_cols(a):
        if DP > d_model:
            return jnp.pad(a, ((0, 0), (0, DP - d_model)))
        return a

    fused_tok_bf = pad_cols(fused_tok).astype(jnp.bfloat16)    # (V, DP)
    fused_pos_bf = pad_cols(fused_pos).astype(jnp.bfloat16)    # (S, DP)
    b2 = pad_cols(b_lin.reshape(1, d_model).astype(jnp.float32))
    g2 = pad_cols(ln_gamma.reshape(1, d_model).astype(jnp.float32))
    be2 = pad_cols(ln_beta.reshape(1, d_model).astype(jnp.float32))

    flops = 2 * N_pad * (V + S) * DP + 10 * N_pad * DP
    bytes_accessed = (2 * N_pad * 4                           # token + pos ids
                      + (V + S) * DP * 2                      # bf16 fused tables
                      + 3 * DP * 4                            # bias/gamma/beta
                      + N_pad * DP * 4)                       # f32 output

    grid_spec = pltpu.PrefetchScalarGridSpec(
        num_scalar_prefetch=0,
        grid=grid,
        in_specs=[
            pl.BlockSpec((TM, 1), lambda r: (r, 0)),          # token ids
            pl.BlockSpec((TM, 1), lambda r: (r, 0)),          # position ids
            pl.BlockSpec((V, DP), lambda r: (0, 0)),          # resident fused tok
            pl.BlockSpec((S, DP), lambda r: (0, 0)),          # resident fused pos
            pl.BlockSpec((1, DP), lambda r: (0, 0)),          # bias
            pl.BlockSpec((1, DP), lambda r: (0, 0)),          # gamma
            pl.BlockSpec((1, DP), lambda r: (0, 0)),          # beta
        ],
        out_specs=pl.BlockSpec((TM, DP), lambda r: (r, 0)),
    )

    out_flat = pl.pallas_call(
        functools.partial(_embed_kernel, d_model=d_model),
        out_shape=jax.ShapeDtypeStruct((N_pad, DP), jnp.float32),
        grid_spec=grid_spec,
        compiler_params=pltpu.CompilerParams(
            dimension_semantics=("parallel",),
            vmem_limit_bytes=48 * 1024 * 1024),
        cost_estimate=pl.CostEstimate(flops=int(flops),
                                      transcendentals=int(N_pad),
                                      bytes_accessed=int(bytes_accessed)),
    )(tok_ids, pos_ids, fused_tok_bf, fused_pos_bf, b2, g2, be2)

    return out_flat[:N, :d_model].reshape(B, S, d_model)


def make_positional_table(max_len, d_emb):
    pos = jnp.arange(max_len, dtype=jnp.float32)[:, None]          # (L, 1)
    i2 = jnp.arange(0, d_emb, 2, dtype=jnp.float32)[None, :]       # (1, d/2)
    div = jnp.exp(-jnp.log(10000.0) * i2 / d_emb)
    ang = pos * div                                                 # (L, d/2)
    pe = jnp.zeros((max_len, d_emb), jnp.float32)
    pe = pe.at[:, 0::2].set(jnp.sin(ang))
    pe = pe.at[:, 1::2].set(jnp.cos(ang))
    return pe


if __name__ == "__main__":
    key = jax.random.PRNGKey(0)
    vocab_size, d_embedding, d_model = 64, 32, 32
    pad_idx, max_len = 0, 512
    B, S = 2, 8

    k_tok, k_w, k_b, k_seq = jax.random.split(key, 4)
    tok_table = jax.random.normal(k_tok, (vocab_size, d_embedding), jnp.float32)
    tok_table = tok_table.at[pad_idx].set(0.0)        # padding_idx row is zero
    pos_table = make_positional_table(max_len, d_embedding)
    w_lin = jax.random.normal(k_w, (d_model, d_embedding), jnp.float32) * 0.05
    b_lin = jax.random.normal(k_b, (d_model,), jnp.float32) * 0.01
    ln_gamma = jnp.ones((d_model,), jnp.float32)
    ln_beta = jnp.zeros((d_model,), jnp.float32)

    sequence = jax.random.randint(k_seq, (B, S), 0, vocab_size, jnp.int32)

    out = transformer_embedding_fwd(sequence, tok_table, pos_table,
                                    w_lin, b_lin, ln_gamma, ln_beta)
    jax.block_until_ready(out)

    # Reference 1: mirrors the kernel's fused bf16 data path (tight check).
    fused_tok = (tok_table @ w_lin.T).astype(jnp.bfloat16).astype(jnp.float32)
    fused_pos = (pos_table[:S] @ w_lin.T).astype(jnp.bfloat16).astype(jnp.float32)
    y_ref = jnp.take(fused_tok, sequence, axis=0) + fused_pos[None] + b_lin
    mu = y_ref.mean(-1, keepdims=True)
    var = ((y_ref - mu) ** 2).mean(-1, keepdims=True)
    ref = (y_ref - mu) * lax.rsqrt(var + LN_EPS) * ln_gamma + ln_beta
    assert jnp.allclose(out, ref, atol=2e-3, rtol=2e-3)

    # Reference 2: original module math order in pure f32 (loose check, shows
    # the algebraic fusion + bf16 tables preserve the module's semantics).
    x_f32 = jnp.take(tok_table, sequence, axis=0) + pos_table[:S][None]
    y_f32 = x_f32 @ w_lin.T + b_lin
    mu2 = y_f32.mean(-1, keepdims=True)
    var2 = ((y_f32 - mu2) ** 2).mean(-1, keepdims=True)
    ref_f32 = (y_f32 - mu2) * lax.rsqrt(var2 + LN_EPS) * ln_gamma + ln_beta
    assert jnp.allclose(out, ref_f32, atol=5e-2, rtol=5e-2)

    print("KERNEL_OK")
</pallas_src>

<mosaic_0001>
module attributes {stable_mosaic.version = 11 : i64} {
  func.func @_embed_kernel(%arg0: i32, %arg1: memref<16x1xi32, #tpu.memory_space<vmem>>, %arg2: memref<16x1xi32, #tpu.memory_space<vmem>>, %arg3: memref<64x128xbf16, #tpu.memory_space<vmem>>, %arg4: memref<8x128xbf16, #tpu.memory_space<vmem>>, %arg5: memref<1x128xf32, #tpu.memory_space<vmem>>, %arg6: memref<1x128xf32, #tpu.memory_space<vmem>>, %arg7: memref<1x128xf32, #tpu.memory_space<vmem>>, %arg8: memref<16x128xf32, #tpu.memory_space<vmem>>) attributes {dimension_semantics = [#tpu.dimension_semantics<parallel>], iteration_bounds = array<i64: 1>, scalar_prefetch = 0 : i64, scratch_operands = 0 : i64, tpu.core_type = #tpu.core_type<tc>, window_params = [{transform_indices = @transform_0, window_bounds = array<i64: 16, 1>}, {transform_indices = @transform_1, window_bounds = array<i64: 16, 1>}, {pipeline_mode = #tpu.pipeline_mode<synchronous>, transform_indices = @transform_2, window_bounds = array<i64: 64, 128>}, {pipeline_mode = #tpu.pipeline_mode<synchronous>, transform_indices = @transform_3, window_bounds = array<i64: 8, 128>}, {pipeline_mode = #tpu.pipeline_mode<synchronous>, transform_indices = @transform_4, window_bounds = array<i64: 1, 128>}, {pipeline_mode = #tpu.pipeline_mode<synchronous>, transform_indices = @transform_5, window_bounds = array<i64: 1, 128>}, {pipeline_mode = #tpu.pipeline_mode<synchronous>, transform_indices = @transform_6, window_bounds = array<i64: 1, 128>}, {transform_indices = @transform_7, window_bounds = array<i64: 16, 128>}]} {
    %c0 = arith.constant 0 : index
    %c0_0 = arith.constant 0 : index
    %0 = vector.load %arg1[%c0, %c0_0] : memref<16x1xi32, #tpu.memory_space<vmem>>, vector<16x1xi32>
    %c0_1 = arith.constant 0 : index
    %c0_2 = arith.constant 0 : index
    %1 = vector.load %arg2[%c0_1, %c0_2] : memref<16x1xi32, #tpu.memory_space<vmem>>, vector<16x1xi32>
    %2 = tpu.iota {dimensions = array<i32: 1>} : vector<16x64xi32>
    %3 = vector.broadcast %0 : vector<16x1xi32> to vector<16x64xi32>
    %4 = arith.cmpi eq, %3, %2 : vector<16x64xi32>
    %5 = arith.extui %4 : vector<16x64xi1> to vector<16x64xi32>
    %6 = arith.sitofp %5 : vector<16x64xi32> to vector<16x64xf32>
    %7 = arith.truncf %6 : vector<16x64xf32> to vector<16x64xbf16>
    %8 = tpu.iota {dimensions = array<i32: 1>} : vector<16x8xi32>
    %9 = vector.broadcast %1 : vector<16x1xi32> to vector<16x8xi32>
    %10 = arith.cmpi eq, %9, %8 : vector<16x8xi32>
    %11 = arith.extui %10 : vector<16x8xi1> to vector<16x8xi32>
    %12 = arith.sitofp %11 : vector<16x8xi32> to vector<16x8xf32>
    %13 = arith.truncf %12 : vector<16x8xf32> to vector<16x8xbf16>
    %c0_3 = arith.constant 0 : index
    %c0_4 = arith.constant 0 : index
    %14 = vector.load %arg3[%c0_3, %c0_4] : memref<64x128xbf16, #tpu.memory_space<vmem>>, vector<64x128xbf16>
    %cst = arith.constant dense<0.000000e+00> : vector<16x128xf32>
    %15 = tpu.matmul %7, %14, %cst {dimension_numbers = #tpu.dot_dimension_numbers<[1], [0], [0], [1], [0, 0, 1, 1], [], []>} : vector<16x64xbf16>, vector<64x128xbf16>, vector<16x128xf32> -> vector<16x128xf32>
    %c0_5 = arith.constant 0 : index
    %c0_6 = arith.constant 0 : index
    %16 = vector.load %arg4[%c0_5, %c0_6] : memref<8x128xbf16, #tpu.memory_space<vmem>>, vector<8x128xbf16>
    %cst_7 = arith.constant dense<0.000000e+00> : vector<16x128xf32>
    %17 = tpu.matmul %13, %16, %cst_7 {dimension_numbers = #tpu.dot_dimension_numbers<[1], [0], [0], [1], [0, 0, 1, 1], [], []>} : vector<16x8xbf16>, vector<8x128xbf16>, vector<16x128xf32> -> vector<16x128xf32>
    %18 = arith.addf %15, %17 : vector<16x128xf32>
    %c0_8 = arith.constant 0 : index
    %c0_9 = arith.constant 0 : index
    %19 = vector.load %arg5[%c0_8, %c0_9] : memref<1x128xf32, #tpu.memory_space<vmem>>, vector<1x128xf32>
    %20 = vector.broadcast %19 : vector<1x128xf32> to vector<16x128xf32>
    %21 = arith.addf %18, %20 : vector<16x128xf32>
    %cst_10 = arith.constant dense<0.000000e+00> : vector<16xf32>
    %22 = vector.multi_reduction <add>, %21, %cst_10 [1] : vector<16x128xf32> to vector<16xf32>
    %23 = vector.shape_cast %22 : vector<16xf32> to vector<16x1xf32>
    %cst_11 = arith.constant 3.125000e-02 : f32
    %24 = vector.broadcast %cst_11 : f32 to vector<16x1xf32>
    %25 = arith.mulf %23, %24 : vector<16x1xf32>
    %26 = vector.broadcast %25 : vector<16x1xf32> to vector<16x128xf32>
    %27 = arith.subf %21, %26 : vector<16x128xf32>
    %28 = tpu.iota {dimensions = array<i32: 1>} : vector<1x128xi32>
    %c32_i32 = arith.constant 32 : i32
    %29 = vector.broadcast %c32_i32 : i32 to vector<1x128xi32>
    %30 = arith.cmpi slt, %28, %29 : vector<1x128xi32>
    %31 = arith.extui %30 : vector<1x128xi1> to vector<1x128xi32>
    %32 = arith.sitofp %31 : vector<1x128xi32> to vector<1x128xf32>
    %33 = vector.broadcast %32 : vector<1x128xf32> to vector<16x128xf32>
    %34 = arith.mulf %27, %33 : vector<16x128xf32>
    %35 = arith.mulf %34, %34 : vector<16x128xf32>
    %cst_12 = arith.constant dense<0.000000e+00> : vector<16xf32>
    %36 = vector.multi_reduction <add>, %35, %cst_12 [1] : vector<16x128xf32> to vector<16xf32>
    %37 = vector.shape_cast %36 : vector<16xf32> to vector<16x1xf32>
    %cst_13 = arith.constant 3.125000e-02 : f32
    %38 = vector.broadcast %cst_13 : f32 to vector<16x1xf32>
    %39 = arith.mulf %37, %38 : vector<16x1xf32>
    %cst_14 = arith.constant 9.99999974E-6 : f32
    %40 = vector.broadcast %cst_14 : f32 to vector<16x1xf32>
    %41 = arith.addf %39, %40 : vector<16x1xf32>
    %42 = math.rsqrt %41 : vector<16x1xf32>
    %43 = vector.broadcast %42 : vector<16x1xf32> to vector<16x128xf32>
    %44 = arith.mulf %34, %43 : vector<16x128xf32>
    %c0_15 = arith.constant 0 : index
    %c0_16 = arith.constant 0 : index
    %45 = vector.load %arg6[%c0_15, %c0_16] : memref<1x128xf32, #tpu.memory_space<vmem>>, vector<1x128xf32>
    %46 = vector.broadcast %45 : vector<1x128xf32> to vector<16x128xf32>
    %47 = arith.mulf %44, %46 : vector<16x128xf32>
    %c0_17 = arith.constant 0 : index
    %c0_18 = arith.constant 0 : index
    %48 = vector.load %arg7[%c0_17, %c0_18] : memref<1x128xf32, #tpu.memory_space<vmem>>, vector<1x128xf32>
    %49 = vector.broadcast %48 : vector<1x128xf32> to vector<16x128xf32>
    %50 = arith.addf %47, %49 : vector<16x128xf32>
    %c0_19 = arith.constant 0 : index
    %c0_20 = arith.constant 0 : index
    %51 = vector.load %arg8[%c0_19, %c0_20] : memref<16x128xf32, #tpu.memory_space<vmem>>, vector<16x128xf32>
    tpu.vector_store %arg8[%c0_19, %c0_20], %50 {strides = array<i32>} : memref<16x128xf32, #tpu.memory_space<vmem>>, vector<16x128xf32>,
    return
  }
  func.func @transform_0(%arg0: i32) -> (i32, i32) {
    %c0_i32 = arith.constant 0 : i32
    %c0_i32_0 = arith.constant 0 : i32
    return %arg0, %c0_i32 : i32, i32
  }
  func.func @transform_1(%arg0: i32) -> (i32, i32) {
    %c0_i32 = arith.constant 0 : i32
    %c0_i32_0 = arith.constant 0 : i32
    return %arg0, %c0_i32 : i32, i32
  }
  func.func @transform_2(%arg0: i32) -> (i32, i32) {
    %c0_i32 = arith.constant 0 : i32
    %c0_i32_0 = arith.constant 0 : i32
    %c0_i32_1 = arith.constant 0 : i32
    return %c0_i32, %c0_i32_0 : i32, i32
  }
  func.func @transform_3(%arg0: i32) -> (i32, i32) {
    %c0_i32 = arith.constant 0 : i32
    %c0_i32_0 = arith.constant 0 : i32
    %c0_i32_1 = arith.constant 0 : i32
    return %c0_i32, %c0_i32_0 : i32, i32
  }
  func.func @transform_4(%arg0: i32) -> (i32, i32) {
    %c0_i32 = arith.constant 0 : i32
    %c0_i32_0 = arith.constant 0 : i32
    %c0_i32_1 = arith.constant 0 : i32
    return %c0_i32, %c0_i32_0 : i32, i32
  }
  func.func @transform_5(%arg0: i32) -> (i32, i32) {
    %c0_i32 = arith.constant 0 : i32
    %c0_i32_0 = arith.constant 0 : i32
    %c0_i32_1 = arith.constant 0 : i32
    return %c0_i32, %c0_i32_0 : i32, i32
  }
  func.func @transform_6(%arg0: i32) -> (i32, i32) {
    %c0_i32 = arith.constant 0 : i32
    %c0_i32_0 = arith.constant 0 : i32
    %c0_i32_1 = arith.constant 0 : i32
    return %c0_i32, %c0_i32_0 : i32, i32
  }
  func.func @transform_7(%arg0: i32) -> (i32, i32) {
    %c0_i32 = arith.constant 0 : i32
    %c0_i32_0 = arith.constant 0 : i32
    return %arg0, %c0_i32 : i32, i32
  }
}

</mosaic_0001>

<llo_original>
// kernel: tpu_custom_call.1
$region0: #{tpu_custom_call.1}
  #allocation0 [shape = 'u32[]', space=smem, size = 0x4, offset = 0x4, fixed_abs, tag = 'smem constant byte address 0x4 - core index']
  #allocation1 [shape = 'u32[144,128]{1,0:T(1,128)}', space=vmem, size = 0x12000, scoped, tag = 'internal scratch']
  %s0 = inlined_call_operand.vmem [shape: s32[16,1], index: 0, kind: input, shape index: {}]
  %s1 = inlined_call_operand.vmem [shape: s32[16,1], index: 1, kind: input, shape index: {}]
  %s2 = inlined_call_operand.vmem [shape: bf16[64,128], index: 2, kind: input, shape index: {}]
  %s3 = inlined_call_operand.vmem [shape: bf16[8,128], index: 3, kind: input, shape index: {}]
  %s4 = inlined_call_operand.vmem [shape: f32[1,128], index: 4, kind: input, shape index: {}]
  %s5 = inlined_call_operand.vmem [shape: f32[1,128], index: 5, kind: input, shape index: {}]
  %s6 = inlined_call_operand.vmem [shape: f32[1,128], index: 6, kind: input, shape index: {}]
  %s7 = inlined_call_operand.hbm [shape: f32[16,128], index: 7, kind: output, shape index: {}]
  %s8 = sld [smem:[#allocation0]]
  $region38: #{tpu_custom_call.1} parent=0
    _
  %s10 = ssub.s32 1, %s8
  %s11 = scalar_select 0, %s10, %s8
  $region1: #{tpu_custom_call.1} parent=0
    #allocation2 [shape = 'u8[8192]{0}', space=vmem, size = 0x2000, scoped, tag = 'output window, operand 0, single buffered']
    #allocation3 [shape = 's32[1]{0}', space=sflag, size = 0x4, scoped, tag = 'scoped memory for tpu_custom_call.1']
    %12 = vsyncpa [#allocation3], 0
    // Predicated region
    $region2: #{tpu_custom_call.1} parent=1 // pred_check
      _
    $region3: #{tpu_custom_call.1} parent=1 // pred_check_branch
      %14 = sbr.rel (0) target = $region5
    $region4: #{tpu_custom_call.1} parent=1 // pred_region
      _
    $region5: #{tpu_custom_call.1} parent=1 // pred_fallthru
      _
    // Predicated region
    $region6: #{tpu_custom_call.1} parent=1 // pred_check
      _
    $region7: #{tpu_custom_call.1} parent=1 // pred_check_branch
      %16 = sbr.rel (0) target = $region9
    $region8: #{tpu_custom_call.1} parent=1 // pred_region
      _
    $region9: #{tpu_custom_call.1} parent=1 // pred_fallthru
      _
    // Predicated region
    $region10: #{tpu_custom_call.1} parent=1 // pred_check
      _
    $region11: #{tpu_custom_call.1} parent=1 // pred_check_branch
      %18 = sbr.rel (0) target = $region13
    $region12: #{tpu_custom_call.1} parent=1 // pred_region
      _
    $region13: #{tpu_custom_call.1} parent=1 // pred_fallthru
      _
    // Predicated region
    $region14: #{tpu_custom_call.1} parent=1 // pred_check
      _
    $region15: #{tpu_custom_call.1} parent=1 // pred_check_branch
      %20 = sbr.rel (0) target = $region17
    $region16: #{tpu_custom_call.1} parent=1 // pred_region
      _
    $region17: #{tpu_custom_call.1} parent=1 // pred_fallthru
      _
    // Predicated region
    $region18: #{tpu_custom_call.1} parent=1 // pred_check
      _
    $region19: #{tpu_custom_call.1} parent=1 // pred_check_branch
      %22 = sbr.rel (0) target = $region21
    $region20: #{tpu_custom_call.1} parent=1 // pred_region
      _
    $region21: #{tpu_custom_call.1} parent=1 // pred_fallthru
      _
    // Predicated region
    $region22: #{tpu_custom_call.1} parent=1 // pred_check
      _
    $region23: #{tpu_custom_call.1} parent=1 // pred_check_branch
      %24 = sbr.rel (0) target = $region25
    $region24: #{tpu_custom_call.1} parent=1 // pred_region
      _
    $region25: #{tpu_custom_call.1} parent=1 // pred_fallthru
      _
    // Predicated region
    $region26: #{tpu_custom_call.1} parent=1 // pred_check
      _
    $region27: #{tpu_custom_call.1} parent=1 // pred_check_branch
      %26 = sbr.rel (0) target = $region29
    $region28: #{tpu_custom_call.1} parent=1 // pred_region
      _
    $region29: #{tpu_custom_call.1} parent=1 // pred_fallthru
      _
    %v28 = vld [vmem:[%s0] sm:$0xff]
    %v29 = vld [vmem:[%s0 + $0x8] sm:$0xff]
    %v30 = vld [vmem:[%s1] sm:$0xff]
    %v31 = vld [vmem:[%s1 + $0x8] sm:$0xff]
    %v32 = vlaneseq
    %v33 = vand.u32 %v32, 127
    %34 = vset.pattern.permute.xlu0 0
    %35 = vperm.xlu0 %34, %v28
    %v36 = vpop.permute.xlu0 %35
    %37 = vset.pattern.permute.xlu0 0
    %38 = vperm.xlu0 %37, %v29
    %v39 = vpop.permute.xlu0 %38
    %vm40 = vcmp.eq.s32.totalorder %v36, %v33
    %vm41 = vcmp.eq.s32.totalorder %v39, %v33
    %v42 = vsel %vm40, 1, 0
    %v43 = vsel %vm41, 1, 0
    %v44 = vcvt.s32.f32 %v42
    %v45 = vcvt.s32.f32 %v43
    %v46 = vpack.c.bf16 %v45, %v44
    %47 = vset.pattern.permute.xlu0 0
    %48 = vperm.xlu0 %47, %v30
    %v49 = vpop.permute.xlu0 %48
    %50 = vset.pattern.permute.xlu0 0
    %51 = vperm.xlu0 %50, %v31
    %v52 = vpop.permute.xlu0 %51
    %vm53 = vcmp.eq.s32.totalorder %v49, %v33
    %vm54 = vcmp.eq.s32.totalorder %v52, %v33
    %v55 = vsel %vm53, 1, 0
    %v56 = vsel %vm54, 1, 0
    %v57 = vcvt.s32.f32 %v55
    %v58 = vcvt.s32.f32 %v56
    %v59 = vpack.c.bf16 %v58, %v57
    %v60 = vld [vmem:[%s2] sm:$0xf]
    %v61 = vld [vmem:[%s2 + $0x4] sm:$0xf]
    %v62 = vld [vmem:[%s2 + $0x8] sm:$0xf]
    %v63 = vld [vmem:[%s2 + $0xc] sm:$0xf]
    %v64 = vld [vmem:[%s2 + $0x10] sm:$0xf]
    %v65 = vld [vmem:[%s2 + $0x14] sm:$0xf]
    %v66 = vld [vmem:[%s2 + $0x18] sm:$0xf]
    %v67 = vld [vmem:[%s2 + $0x1c] sm:$0xf]
    %v68 = vld [vmem:[%s3] sm:$0xf]
    %vm69 = vcmask 64512
    %v71 = vsel %vm69, %v59, 0
    %vm73 = vcmask 1043456
    %v75 = vsel %vm73, %v68, 0
    %77 = vmatprep.subr.bf16.mxu0 0
    %78 = vmatpush1.bf16.msra.mxu0 %v75
    %79 = vmatprep.subr.bf16.mxu0 0
    %80 = vmatpush1.bf16.msra.mxu0 0
    %81 = vmatprep.subr.bf16.mxu0 0
    %82 = vmatpush1.bf16.msra.mxu0 0
    %83 = vmatprep.subr.bf16.mxu0 0
    %84 = vmatpush1.bf16.msra.mxu0 0
    %85 = vmatprep.subr.bf16.mxu0 0
    %86 = vmatpush1.bf16.msra.mxu0 0
    %87 = vmatprep.subr.bf16.mxu0 0
    %88 = vmatpush1.bf16.msra.mxu0 0
    %89 = vmatprep.subr.bf16.mxu0 0
    %90 = vmatpush1.bf16.msra.mxu0 0
    %91 = vmatprep.subr.bf16.mxu0 0
    %92 = vmatpush1.bf16.msra.mxu0 0
    %93 = vmatprep.subr.bf16.mxu0 0
    %94 = vmatpush1.bf16.msra.mxu0 0
    %95 = vmatprep.subr.bf16.mxu0 0
    %96 = vmatpush1.bf16.msra.mxu0 0
    %97 = vmatprep.subr.bf16.mxu0 0
    %98 = vmatpush1.bf16.msra.mxu0 0
    %99 = vmatprep.subr.bf16.mxu0 0
    %100 = vmatpush1.bf16.msra.mxu0 0
    %101 = vmatprep.subr.bf16.mxu0 0
    %102 = vmatpush1.bf16.msra.mxu0 0
    %103 = vmatprep.subr.bf16.mxu0 0
    %104 = vmatpush1.bf16.msra.mxu0 0
    %105 = vmatprep.subr.bf16.mxu0 0
    %106 = vmatpush1.bf16.msra.mxu0 0
    %107 = vmatprep.subr.bf16.mxu0 0
    %108 = vmatpush1.bf16.msra.mxu0 0
    %109 = vmatprep.mubr.bf16.mxu0 0
    %110 = vmatmul.mubr.bf16.gmra.mrb[0].mxu0 %v71
    %v111 = vpop.f32.mrb[0].mxu0
    %v112 = vadd.f32 0.0, %v111
    %v113 = vpop.f32.mrb[0].mxu0
    %v114 = vpop.f32.mrb[0].mxu0
    %v115 = vadd.f32 0.0, %v114
    %v116 = vpop.f32.mrb[0].mxu0
    %117 = vdwg.mxu0
    %v126 = vunpack.c.l.b16 %v60
    %v127 = vunpack.c.l.b16 %v61
    %v128 = vunpack.c.l.b16 %v62
    %v129 = vunpack.c.l.b16 %v63
    %v130 = vunpack.c.l.b16 %v64
    %v131 = vunpack.c.l.b16 %v65
    %v132 = vunpack.c.l.b16 %v66
    %v133 = vunpack.c.l.b16 %v67
    %v134 = vpack.c.b16 %v127, %v126
    %v135 = vpack.c.b16 %v129, %v128
    %v136 = vpack.c.b16 %v131, %v130
    %v137 = vpack.c.b16 %v133, %v132
    %vm142 = vcmask 523264
    %v144 = vsel %vm142, %v46, 0
    %146 = vmatprep.subr.bf16.mxu0 0
    %147 = vmatpush1.bf16.msra.mxu0 %v134
    %148 = vmatprep.subr.bf16.mxu0 0
    %149 = vmatpush1.bf16.msra.mxu0 %v135
    %150 = vmatprep.subr.bf16.mxu0 0
    %151 = vmatpush1.bf16.msra.mxu0 %v136
    %152 = vmatprep.subr.bf16.mxu0 0
    %153 = vmatpush1.bf16.msra.mxu0 %v137
    %154 = vmatprep.subr.bf16.mxu0 0
    %155 = vmatpush1.bf16.msra.mxu0 0
    %156 = vmatprep.subr.bf16.mxu0 0
    %157 = vmatpush1.bf16.msra.mxu0 0
    %158 = vmatprep.subr.bf16.mxu0 0
    %159 = vmatpush1.bf16.msra.mxu0 0
    %160 = vmatprep.subr.bf16.mxu0 0
    %161 = vmatpush1.bf16.msra.mxu0 0
    %162 = vmatprep.subr.bf16.mxu0 0
    %163 = vmatpush1.bf16.msra.mxu0 0
    %164 = vmatprep.subr.bf16.mxu0 0
    %165 = vmatpush1.bf16.msra.mxu0 0
    %166 = vmatprep.subr.bf16.mxu0 0
    %167 = vmatpush1.bf16.msra.mxu0 0
    %168 = vmatprep.subr.bf16.mxu0 0
    %169 = vmatpush1.bf16.msra.mxu0 0
    %170 = vmatprep.subr.bf16.mxu0 0
    %171 = vmatpush1.bf16.msra.mxu0 0
    %172 = vmatprep.subr.bf16.mxu0 0
    %173 = vmatpush1.bf16.msra.mxu0 0
    %174 = vmatprep.subr.bf16.mxu0 0
    %175 = vmatpush1.bf16.msra.mxu0 0
    %176 = vmatprep.subr.bf16.mxu0 0
    %177 = vmatpush1.bf16.msra.mxu0 0
    %178 = vmatprep.mubr.bf16.mxu0 0
    %179 = vmatmul.mubr.bf16.gmra.mrb[0].mxu0 %v144
    %v180 = vpop.f32.mrb[0].mxu0
    %v181 = vadd.f32 %v112, %v180
    %v182 = vpop.f32.mrb[0].mxu0
    %v183 = vpop.f32.mrb[0].mxu0
    %v184 = vadd.f32 %v115, %v183
    %v185 = vpop.f32.mrb[0].mxu0
    %186 = vdwg.mxu0
    %v187 = vld [vmem:[%s4] sm:$0x1]
    %v189 = vlaneseq
    %v190 = vshrl.u32 %v189, 7
    %v191 = vsub.s32 0, %v190
    %v192 = vrot.slane %v187, %v191
    %v194 = vadd.f32 %v181, %v192
    %v195 = vadd.f32 %v184, %v192
    %196 = vadd.xlane.f32.xlu0 %v194
    %v197 = vpop.xlane.xlu0 %196
    %198 = vadd.xlane.f32.xlu0 %v195
    %v199 = vpop.xlane.xlu0 %198
    %v200 = vmul.f32 %v197, 0.03125
    %v201 = vmul.f32 %v199, 0.03125
    %v202 = vsub.f32 %v194, %v200
    %v203 = vsub.f32 %v195, %v201
    %vm204 = vcmp.lt.s32.totalorder %v33, 32
    %v205 = vsel %vm204, 1, 0
    %v206 = vcvt.s32.f32 %v205
    %v207 = vmul.f32 %v202, %v206
    %v208 = vmul.f32 %v203, %v206
    %v209 = vmul.f32 %v207, %v207
    %v210 = vmul.f32 %v208, %v208
    %211 = vadd.xlane.f32.xlu0 %v209
    %v212 = vpop.xlane.xlu0 %211
    %213 = vadd.xlane.f32.xlu0 %v210
    %v214 = vpop.xlane.xlu0 %213
    %v215 = vmul.f32 %v212, 0.03125
    %v216 = vmul.f32 %v214, 0.03125
    %v217 = vadd.f32 %v215, 1e-05
    %v218 = vadd.f32 %v216, 1e-05
    %v219 = vrsqrt.pop %v217
    %v220 = vrsqrt.pop %v218
    %v221 = vmul.f32 %v207, %v219
    %v222 = vmul.f32 %v208, %v220
    %v223 = vld [vmem:[%s5] sm:$0x1]
    %v225 = vlaneseq
    %v226 = vshrl.u32 %v225, 7
    %v227 = vsub.s32 0, %v226
    %v228 = vrot.slane %v223, %v227
    %v230 = vmul.f32 %v221, %v228
    %v231 = vmul.f32 %v222, %v228
    %v232 = vld [vmem:[%s6] sm:$0x1]
    %v234 = vlaneseq
    %v235 = vshrl.u32 %v234, 7
    %v236 = vsub.s32 0, %v235
    %v237 = vrot.slane %v232, %v236
    %v239 = vadd.f32 %v230, %v237
    %v240 = vadd.f32 %v231, %v237
    %241 = vst [vmem:[#allocation2] sm:$0xff] %v239
    %242 = vst [vmem:[#allocation2 + $0x8] sm:$0xff] %v240
    // Predicated region
    $region30: #{tpu_custom_call.1} parent=1 // pred_check
      _
    $region31: #{tpu_custom_call.1} parent=1 // pred_check_branch
      %244 = sbr.rel (0) target = $region33
    $region32: #{tpu_custom_call.1} parent=1 // pred_region
      %s246 = ssub.s32 256, 256
      %247 = vsyncadd [#allocation3], %s246
      %s248 = sshll.u32 [#allocation2], 4
      %s249 = int_to_ptr.vmem [resolvable:$true] %s248
      %254 = dma.vmem_to_hbm [thread:$0]  %s249, 256, %s7, [#allocation3], 128, 128, 8
    $region33: #{tpu_custom_call.1} parent=1 // pred_fallthru
      _
    // Predicated region
    $region34: #{tpu_custom_call.1} parent=1 // pred_check
      _
    $region35: #{tpu_custom_call.1} parent=1 // pred_check_branch
      %256 = sbr.rel (0) target = $region37
    $region36: #{tpu_custom_call.1} parent=1 // pred_region
      %257 = dma.done [#allocation3], 256
    $region37: #{tpu_custom_call.1} parent=1 // pred_fallthru
      _
    %258 = vsyncpa [#allocation3], 1

</llo_original>
